<compile_context>
chip_gen: v5e
topology: v5e:2x2
jax: 0.10.0
libtpu: 0.0.40
codegen_flags: <defaults>
</compile_context>

<pallas_src>
import functools

import jax
import jax.numpy as jnp
from jax.experimental import pallas as pl
from jax.experimental.pallas import tpu as pltpu


def _round_up(x, m):
    return ((x + m - 1) // m) * m


def weightnet_kernel(z_ref, w1_ref, b1_ref, w2_ref, b2_ref, w3_ref, b3_ref, out_ref):
    # Layer 1: (TM,128) bf16 @ (128,128) bf16 -> f32 accumulate; bias+ReLU in f32.
    h1 = jnp.dot(z_ref[...], w1_ref[...], preferred_element_type=jnp.float32)
    h1 = jnp.maximum(h1 + b1_ref[...], 0.0)

    # Layer 2: cast activations back to bf16 for the MXU, accumulate in f32.
    h2 = jnp.dot(h1.astype(jnp.bfloat16), w2_ref[...],
                 preferred_element_type=jnp.float32)
    h2 = jnp.maximum(h2 + b2_ref[...], 0.0)

    # Layer 3 (out_features = 1), computed directly in transposed orientation:
    # contract w3 (8,128) with h2 (TM,128) over the lane dim (q.k^T pattern)
    # -> (8, TM); rows of w3 are replicated so row 0 is the logit row.
    # Padded columns of w3/h2 are zero, so they contribute nothing.
    prod = jax.lax.dot_general(
        w3_ref[...], h2,
        dimension_numbers=(((1,), (1,)), ((), ())),
        preferred_element_type=jnp.float32)
    logits = prod[0:1, :] + b3_ref[0, 0]          # (1, TM), b3 from SMEM

    # Lane-dense, compact writeback: batch lives in the lane dim.
    out_ref[...] = jax.nn.sigmoid(logits).astype(out_ref.dtype)


@functools.partial(jax.jit, static_argnames=("tm",))
def weight_network_forward(z, w1, b1, w2, b2, w3, b3, *, tm=1024):
    """z: (B,100) f32; w1:(100,128) b1:(1,128) w2:(128,64) b2:(1,64) w3:(64,1) b3:(1,1)."""
    B, K = z.shape
    K_PAD, H = 128, 128                     # padded contraction / hidden widths

    TM = min(tm, _round_up(B, 8))           # rows per grid step
    B_pad = _round_up(B, TM)                # TM either == B_pad or a multiple of 128
    num_tiles = B_pad // TM

    # --- pad + cast operands (single fused XLA pass per tensor) --------------
    # TODO(synk): for K-aligned inputs this pad/cast pass could be skipped and z
    # read by the kernel directly; K=100 forces one pass here.
    z_p = jnp.zeros((B_pad, K_PAD), jnp.bfloat16).at[:B, :K].set(
        z.astype(jnp.bfloat16))
    w1_p = jnp.zeros((K_PAD, H), jnp.bfloat16).at[:K, :].set(
        w1.astype(jnp.bfloat16))
    b1_p = b1.reshape(1, H).astype(jnp.float32)
    w2_p = jnp.zeros((H, H), jnp.bfloat16).at[:, :w2.shape[1]].set(
        w2.astype(jnp.bfloat16))
    b2_p = jnp.zeros((1, H), jnp.float32).at[:, :b2.size].set(
        b2.reshape(1, -1).astype(jnp.float32))
    # w3 as a row vector, replicated over 8 sublanes (avoids an M=1 matmul),
    # zero-padded in the lane dim.
    w3_row = w3.reshape(1, -1).astype(jnp.float32)            # (1, 64)
    w3_blk = jnp.zeros((8, H), jnp.float32).at[:, :w3_row.shape[1]].set(
        jnp.broadcast_to(w3_row, (8, w3_row.shape[1])))
    b3_s = b3.reshape(1, 1).astype(jnp.float32)

    # --- cost estimate --------------------------------------------------------
    flops = B_pad * (2 * K_PAD * H + 2 * H * H) + 2 * 8 * B_pad * H
    bytes_accessed = (
        z_p.size * 2 + w1_p.size * 2 + w2_p.size * 2
        + (b1_p.size + b2_p.size + w3_blk.size + b3_s.size) * 4
        + B_pad * 4
    )
    cost = pl.CostEstimate(flops=flops, transcendentals=B_pad,
                           bytes_accessed=bytes_accessed)

    out = pl.pallas_call(
        weightnet_kernel,
        out_shape=jax.ShapeDtypeStruct((1, B_pad), jnp.float32),
        grid_spec=pltpu.PrefetchScalarGridSpec(
            num_scalar_prefetch=0,
            grid=(num_tiles,),
            in_specs=[
                pl.BlockSpec((TM, K_PAD), lambda i: (i, 0)),        # z tile
                pl.BlockSpec((K_PAD, H), lambda i: (0, 0)),         # w1 (resident)
                pl.BlockSpec((1, H), lambda i: (0, 0)),             # b1
                pl.BlockSpec((H, H), lambda i: (0, 0)),             # w2 (resident)
                pl.BlockSpec((1, H), lambda i: (0, 0)),             # b2
                pl.BlockSpec((8, H), lambda i: (0, 0)),             # w3 block
                pl.BlockSpec(memory_space=pltpu.MemorySpace.SMEM),  # b3 scalar
            ],
            out_specs=pl.BlockSpec((1, TM), lambda i: (0, i)),      # batch -> lanes
        ),
        compiler_params=pltpu.CompilerParams(
            dimension_semantics=("parallel",),   # batch tiles independent
        ),
        cost_estimate=cost,
    )(z_p, w1_p, b1_p, w2_p, b2_p, w3_blk, b3_s)

    return out[0, :B].reshape(B, 1)


def init_params(key):
    # Deterministic synthetic parameters, (in, out) layout (== nn.Linear semantics).
    k1, k2, k3, k4, k5, k6 = jax.random.split(key, 6)
    w1 = jax.random.normal(k1, (100, 128), jnp.float32) * 0.05
    b1 = jax.random.normal(k2, (1, 128), jnp.float32) * 0.05
    w2 = jax.random.normal(k3, (128, 64), jnp.float32) * 0.05
    b2 = jax.random.normal(k4, (1, 64), jnp.float32) * 0.05
    w3 = jax.random.normal(k5, (64, 1), jnp.float32) * 0.05
    b3 = jax.random.normal(k6, (1, 1), jnp.float32) * 0.05
    return w1, b1, w2, b2, w3, b3


if __name__ == "__main__":
    key = jax.random.PRNGKey(0)
    kz, kp = jax.random.split(key)

    B = 8
    z = jax.random.normal(kz, (B, 100), jnp.float32)
    w1, b1, w2, b2, w3, b3 = init_params(kp)

    out = weight_network_forward(z, w1, b1, w2, b2, w3, b3)
    out = jax.block_until_ready(out)

    # Pure-JAX f32 reference of the same forward pass.
    h1 = jnp.maximum(z @ w1 + b1, 0.0)
    h2 = jnp.maximum(h1 @ w2 + b2, 0.0)
    ref = jax.nn.sigmoid(h2 @ w3 + b3)

    assert out.shape == (B, 1)
    # bf16 matmul operands (f32 accumulate) vs. full-f32 reference -> loose atol.
    assert jnp.allclose(out, ref, atol=2e-2), "mismatch vs reference"
    print("KERNEL_OK")
</pallas_src>

<mosaic_0001>
module attributes {stable_mosaic.version = 11 : i64} {
  func.func @weightnet_kernel(%arg0: i32, %arg1: memref<8x128xbf16, #tpu.memory_space<vmem>>, %arg2: memref<128x128xbf16, #tpu.memory_space<vmem>>, %arg3: memref<1x128xf32, #tpu.memory_space<vmem>>, %arg4: memref<128x128xbf16, #tpu.memory_space<vmem>>, %arg5: memref<1x128xf32, #tpu.memory_space<vmem>>, %arg6: memref<8x128xf32, #tpu.memory_space<vmem>>, %arg7: memref<1x1xf32, #tpu.memory_space<smem>>, %arg8: memref<1x8xf32, #tpu.memory_space<vmem>>) attributes {dimension_semantics = [#tpu.dimension_semantics<parallel>], iteration_bounds = array<i64: 1>, scalar_prefetch = 0 : i64, scratch_operands = 0 : i64, tpu.core_type = #tpu.core_type<tc>, window_params = [{transform_indices = @transform_0, window_bounds = array<i64: 8, 128>}, {pipeline_mode = #tpu.pipeline_mode<synchronous>, transform_indices = @transform_1, window_bounds = array<i64: 128, 128>}, {pipeline_mode = #tpu.pipeline_mode<synchronous>, transform_indices = @transform_2, window_bounds = array<i64: 1, 128>}, {pipeline_mode = #tpu.pipeline_mode<synchronous>, transform_indices = @transform_3, window_bounds = array<i64: 128, 128>}, {pipeline_mode = #tpu.pipeline_mode<synchronous>, transform_indices = @transform_4, window_bounds = array<i64: 1, 128>}, {pipeline_mode = #tpu.pipeline_mode<synchronous>, transform_indices = @transform_5, window_bounds = array<i64: 8, 128>}, {transform_indices = @transform_6, window_bounds = array<i64: 1, 1>}, {transform_indices = @transform_7, window_bounds = array<i64: 1, 8>}]} {
    %c0 = arith.constant 0 : index
    %c0_0 = arith.constant 0 : index
    %0 = vector.load %arg1[%c0, %c0_0] : memref<8x128xbf16, #tpu.memory_space<vmem>>, vector<8x128xbf16>
    %c0_1 = arith.constant 0 : index
    %c0_2 = arith.constant 0 : index
    %1 = vector.load %arg2[%c0_1, %c0_2] : memref<128x128xbf16, #tpu.memory_space<vmem>>, vector<128x128xbf16>
    %cst = arith.constant dense<0.000000e+00> : vector<8x128xf32>
    %2 = tpu.matmul %0, %1, %cst {dimension_numbers = #tpu.dot_dimension_numbers<[1], [0], [0], [1], [0, 0, 1, 1], [], []>} : vector<8x128xbf16>, vector<128x128xbf16>, vector<8x128xf32> -> vector<8x128xf32>
    %c0_3 = arith.constant 0 : index
    %c0_4 = arith.constant 0 : index
    %3 = vector.load %arg3[%c0_3, %c0_4] : memref<1x128xf32, #tpu.memory_space<vmem>>, vector<1x128xf32>
    %4 = vector.broadcast %3 : vector<1x128xf32> to vector<8x128xf32>
    %5 = arith.addf %2, %4 : vector<8x128xf32>
    %cst_5 = arith.constant 0.000000e+00 : f32
    %6 = vector.broadcast %cst_5 : f32 to vector<8x128xf32>
    %7 = arith.maximumf %5, %6 : vector<8x128xf32>
    %8 = arith.truncf %7 : vector<8x128xf32> to vector<8x128xbf16>
    %c0_6 = arith.constant 0 : index
    %c0_7 = arith.constant 0 : index
    %9 = vector.load %arg4[%c0_6, %c0_7] : memref<128x128xbf16, #tpu.memory_space<vmem>>, vector<128x128xbf16>
    %cst_8 = arith.constant dense<0.000000e+00> : vector<8x128xf32>
    %10 = tpu.matmul %8, %9, %cst_8 {dimension_numbers = #tpu.dot_dimension_numbers<[1], [0], [0], [1], [0, 0, 1, 1], [], []>} : vector<8x128xbf16>, vector<128x128xbf16>, vector<8x128xf32> -> vector<8x128xf32>
    %c0_9 = arith.constant 0 : index
    %c0_10 = arith.constant 0 : index
    %11 = vector.load %arg5[%c0_9, %c0_10] : memref<1x128xf32, #tpu.memory_space<vmem>>, vector<1x128xf32>
    %12 = vector.broadcast %11 : vector<1x128xf32> to vector<8x128xf32>
    %13 = arith.addf %10, %12 : vector<8x128xf32>
    %cst_11 = arith.constant 0.000000e+00 : f32
    %14 = vector.broadcast %cst_11 : f32 to vector<8x128xf32>
    %15 = arith.maximumf %13, %14 : vector<8x128xf32>
    %c0_12 = arith.constant 0 : index
    %c0_13 = arith.constant 0 : index
    %16 = vector.load %arg6[%c0_12, %c0_13] : memref<8x128xf32, #tpu.memory_space<vmem>>, vector<8x128xf32>
    %cst_14 = arith.constant dense<0.000000e+00> : vector<8x8xf32>
    %17 = tpu.matmul %16, %15, %cst_14 {dimension_numbers = #tpu.dot_dimension_numbers<[1], [1], [0], [0], [0, 0, 1, 0], [], []>} : vector<8x128xf32>, vector<8x128xf32>, vector<8x8xf32> -> vector<8x8xf32>
    %18 = vector.extract_strided_slice %17 {offsets = [0, 0], sizes = [1, 8], strides = [1, 1]} : vector<8x8xf32> to vector<1x8xf32>
    %c0_15 = arith.constant 0 : index
    %c0_16 = arith.constant 0 : index
    %19 = memref.load %arg7[%c0_15, %c0_16] : memref<1x1xf32, #tpu.memory_space<smem>>
    %20 = vector.broadcast %19 : f32 to vector<1x8xf32>
    %21 = arith.addf %18, %20 : vector<1x8xf32>
    %22 = arith.negf %21 : vector<1x8xf32>
    %23 = math.exp %22 : vector<1x8xf32>
    %cst_17 = arith.constant 1.000000e+00 : f32
    %24 = vector.broadcast %cst_17 : f32 to vector<1x8xf32>
    %25 = arith.addf %24, %23 : vector<1x8xf32>
    %26 = arith.divf %24, %25 : vector<1x8xf32>
    %c0_18 = arith.constant 0 : index
    %c0_19 = arith.constant 0 : index
    %27 = vector.load %arg8[%c0_18, %c0_19] : memref<1x8xf32, #tpu.memory_space<vmem>>, vector<1x8xf32>
    tpu.vector_store %arg8[%c0_18, %c0_19], %26 {strides = array<i32>} : memref<1x8xf32, #tpu.memory_space<vmem>>, vector<1x8xf32>,
    return
  }
  func.func @transform_0(%arg0: i32) -> (i32, i32) {
    %c0_i32 = arith.constant 0 : i32
    %c0_i32_0 = arith.constant 0 : i32
    return %arg0, %c0_i32 : i32, i32
  }
  func.func @transform_1(%arg0: i32) -> (i32, i32) {
    %c0_i32 = arith.constant 0 : i32
    %c0_i32_0 = arith.constant 0 : i32
    %c0_i32_1 = arith.constant 0 : i32
    return %c0_i32, %c0_i32_0 : i32, i32
  }
  func.func @transform_2(%arg0: i32) -> (i32, i32) {
    %c0_i32 = arith.constant 0 : i32
    %c0_i32_0 = arith.constant 0 : i32
    %c0_i32_1 = arith.constant 0 : i32
    return %c0_i32, %c0_i32_0 : i32, i32
  }
  func.func @transform_3(%arg0: i32) -> (i32, i32) {
    %c0_i32 = arith.constant 0 : i32
    %c0_i32_0 = arith.constant 0 : i32
    %c0_i32_1 = arith.constant 0 : i32
    return %c0_i32, %c0_i32_0 : i32, i32
  }
  func.func @transform_4(%arg0: i32) -> (i32, i32) {
    %c0_i32 = arith.constant 0 : i32
    %c0_i32_0 = arith.constant 0 : i32
    %c0_i32_1 = arith.constant 0 : i32
    return %c0_i32, %c0_i32_0 : i32, i32
  }
  func.func @transform_5(%arg0: i32) -> (i32, i32) {
    %c0_i32 = arith.constant 0 : i32
    %c0_i32_0 = arith.constant 0 : i32
    %c0_i32_1 = arith.constant 0 : i32
    return %c0_i32, %c0_i32_0 : i32, i32
  }
  func.func @transform_6(%arg0: i32) -> (i32, i32) {
    %c0_i32 = arith.constant 0 : i32
    %c0_i32_0 = arith.constant 0 : i32
    %c0_i32_1 = arith.constant 0 : i32
    return %c0_i32, %c0_i32_0 : i32, i32
  }
  func.func @transform_7(%arg0: i32) -> (i32, i32) {
    %c0_i32 = arith.constant 0 : i32
    %c0_i32_0 = arith.constant 0 : i32
    return %c0_i32, %arg0 : i32, i32
  }
}

</mosaic_0001>

<llo_original>
// kernel: weight_network_forward.1
$region0: #{weight_network_forward.1}
  #allocation0 [shape = 'u32[]', space=smem, size = 0x4, offset = 0x4, fixed_abs, tag = 'smem constant byte address 0x4 - core index']
  #allocation1 [shape = 'u32[72,128]{1,0:T(1,128)}', space=vmem, size = 0x9000, scoped, tag = 'internal scratch']
  #allocation2 [shape = 'f32[1,1]{1,0:T(1,128)S(6)}', space=smem, size = 0x200, scoped, tag = 'scoped memory for weight_network_forward.1']
  %s0 = inlined_call_operand.vmem [shape: bf16[8,128], index: 0, kind: input, shape index: {}]
  %s1 = inlined_call_operand.vmem [shape: bf16[128,128], index: 1, kind: input, shape index: {}]
  %s2 = inlined_call_operand.vmem [shape: f32[1,128], index: 2, kind: input, shape index: {}]
  %s3 = inlined_call_operand.vmem [shape: bf16[128,128], index: 3, kind: input, shape index: {}]
  %s4 = inlined_call_operand.vmem [shape: f32[1,128], index: 4, kind: input, shape index: {}]
  %s5 = inlined_call_operand.vmem [shape: f32[8,128], index: 5, kind: input, shape index: {}]
  %s6 = inlined_call_operand.<no memory space> [shape: f32[1,1], index: 6, kind: input, shape index: {}]
  %s7 = inlined_call_operand.hbm [shape: f32[1,8], index: 7, kind: output, shape index: {}]
  %s8 = sld [smem:[#allocation0]]
  $region38: #{weight_network_forward.1} parent=0
    _
  %s10 = ssub.s32 1, %s8
  %s11 = scalar_select 0, %s10, %s8
  %12 = sst [smem:[#allocation2]] %s6
  $region1: #{weight_network_forward.1} parent=0
    #allocation3 [shape = 'u8[512]{0}', space=vmem, size = 0x400, scoped, tag = 'output window, operand 0, single buffered']
    #allocation4 [shape = 's32[1]{0}', space=sflag, size = 0x4, scoped, tag = 'scoped memory for weight_network_forward.1']
    %13 = vsyncpa [#allocation4], 0
    // Predicated region
    $region2: #{weight_network_forward.1} parent=1 // pred_check
      _
    $region3: #{weight_network_forward.1} parent=1 // pred_check_branch
      %15 = sbr.rel (0) target = $region5
    $region4: #{weight_network_forward.1} parent=1 // pred_region
      _
    $region5: #{weight_network_forward.1} parent=1 // pred_fallthru
      _
    // Predicated region
    $region6: #{weight_network_forward.1} parent=1 // pred_check
      _
    $region7: #{weight_network_forward.1} parent=1 // pred_check_branch
      %17 = sbr.rel (0) target = $region9
    $region8: #{weight_network_forward.1} parent=1 // pred_region
      _
    $region9: #{weight_network_forward.1} parent=1 // pred_fallthru
      _
    // Predicated region
    $region10: #{weight_network_forward.1} parent=1 // pred_check
      _
    $region11: #{weight_network_forward.1} parent=1 // pred_check_branch
      %19 = sbr.rel (0) target = $region13
    $region12: #{weight_network_forward.1} parent=1 // pred_region
      _
    $region13: #{weight_network_forward.1} parent=1 // pred_fallthru
      _
    // Predicated region
    $region14: #{weight_network_forward.1} parent=1 // pred_check
      _
    $region15: #{weight_network_forward.1} parent=1 // pred_check_branch
      %21 = sbr.rel (0) target = $region17
    $region16: #{weight_network_forward.1} parent=1 // pred_region
      _
    $region17: #{weight_network_forward.1} parent=1 // pred_fallthru
      _
    // Predicated region
    $region18: #{weight_network_forward.1} parent=1 // pred_check
      _
    $region19: #{weight_network_forward.1} parent=1 // pred_check_branch
      %23 = sbr.rel (0) target = $region21
    $region20: #{weight_network_forward.1} parent=1 // pred_region
      _
    $region21: #{weight_network_forward.1} parent=1 // pred_fallthru
      _
    // Predicated region
    $region22: #{weight_network_forward.1} parent=1 // pred_check
      _
    $region23: #{weight_network_forward.1} parent=1 // pred_check_branch
      %25 = sbr.rel (0) target = $region25
    $region24: #{weight_network_forward.1} parent=1 // pred_region
      _
    $region25: #{weight_network_forward.1} parent=1 // pred_fallthru
      _
    // Predicated region
    $region26: #{weight_network_forward.1} parent=1 // pred_check
      _
    $region27: #{weight_network_forward.1} parent=1 // pred_check_branch
      %27 = sbr.rel (0) target = $region29
    $region28: #{weight_network_forward.1} parent=1 // pred_region
      _
    $region29: #{weight_network_forward.1} parent=1 // pred_fallthru
      _
    %v28 = vld [vmem:[%s0] sm:$0xf]
    %v29 = vld [vmem:[%s1] sm:$0xf]
    %v30 = vld [vmem:[%s1 + $0x4] sm:$0xf]
    %v31 = vld [vmem:[%s1 + $0x8] sm:$0xf]
    %v32 = vld [vmem:[%s1 + $0xc] sm:$0xf]
    %v33 = vld [vmem:[%s1 + $0x10] sm:$0xf]
    %v34 = vld [vmem:[%s1 + $0x14] sm:$0xf]
    %v35 = vld [vmem:[%s1 + $0x18] sm:$0xf]
    %v36 = vld [vmem:[%s1 + $0x1c] sm:$0xf]
    %v37 = vld [vmem:[%s1 + $0x20] sm:$0xf]
    %v38 = vld [vmem:[%s1 + $0x24] sm:$0xf]
    %v39 = vld [vmem:[%s1 + $0x28] sm:$0xf]
    %v40 = vld [vmem:[%s1 + $0x2c] sm:$0xf]
    %v41 = vld [vmem:[%s1 + $0x30] sm:$0xf]
    %v42 = vld [vmem:[%s1 + $0x34] sm:$0xf]
    %v43 = vld [vmem:[%s1 + $0x38] sm:$0xf]
    %v44 = vld [vmem:[%s1 + $0x3c] sm:$0xf]
    %v45 = vld [vmem:[%s2] sm:$0x1]
    %v47 = vperm.slane %v45, 0
    %v65 = vunpack.c.l.b16 %v29
    %v66 = vunpack.c.l.b16 %v30
    %v67 = vunpack.c.l.b16 %v31
    %v68 = vunpack.c.l.b16 %v32
    %v69 = vunpack.c.l.b16 %v33
    %v70 = vunpack.c.l.b16 %v34
    %v71 = vunpack.c.l.b16 %v35
    %v72 = vunpack.c.l.b16 %v36
    %v73 = vunpack.c.l.b16 %v37
    %v74 = vunpack.c.l.b16 %v38
    %v75 = vunpack.c.l.b16 %v39
    %v76 = vunpack.c.l.b16 %v40
    %v77 = vunpack.c.l.b16 %v41
    %v78 = vunpack.c.l.b16 %v42
    %v79 = vunpack.c.l.b16 %v43
    %v80 = vunpack.c.l.b16 %v44
    %v81 = vpack.c.b16 %v66, %v65
    %v82 = vpack.c.b16 %v68, %v67
    %v83 = vpack.c.b16 %v70, %v69
    %v84 = vpack.c.b16 %v72, %v71
    %v85 = vpack.c.b16 %v74, %v73
    %v86 = vpack.c.b16 %v76, %v75
    %v87 = vpack.c.b16 %v78, %v77
    %v88 = vpack.c.b16 %v80, %v79
    %97 = vmatpush.bf16.msra.mxu0 %v88
    %98 = vmatpush.bf16.msra.mxu0 %v87
    %99 = vmatpush.bf16.msra.mxu0 %v86
    %100 = vmatpush.bf16.msra.mxu0 %v85
    %101 = vmatpush.bf16.msra.mxu0 %v84
    %102 = vmatpush.bf16.msra.mxu0 %v83
    %103 = vmatpush.bf16.msra.mxu0 %v82
    %104 = vmatpush.bf16.msra.mxu0 %v81
    %105 = vmatmul.bf16.gmra.mxu0 %v28
    %v106 = vpop.f32.mrf.mxu0
    %v107 = vadd.f32 %v47, %v106
    %v108 = vpop.f32.mrf.mxu0
    %109 = vdwg.mxu0
    %v110 = vmax.f32 %v107, 0.0
    %v111 = vpack.c.bf16 %v110, %v110
    %v112 = vld [vmem:[%s3] sm:$0xf]
    %v113 = vld [vmem:[%s3 + $0x4] sm:$0xf]
    %v114 = vld [vmem:[%s3 + $0x8] sm:$0xf]
    %v115 = vld [vmem:[%s3 + $0xc] sm:$0xf]
    %v116 = vld [vmem:[%s3 + $0x10] sm:$0xf]
    %v117 = vld [vmem:[%s3 + $0x14] sm:$0xf]
    %v118 = vld [vmem:[%s3 + $0x18] sm:$0xf]
    %v119 = vld [vmem:[%s3 + $0x1c] sm:$0xf]
    %v120 = vld [vmem:[%s3 + $0x20] sm:$0xf]
    %v121 = vld [vmem:[%s3 + $0x24] sm:$0xf]
    %v122 = vld [vmem:[%s3 + $0x28] sm:$0xf]
    %v123 = vld [vmem:[%s3 + $0x2c] sm:$0xf]
    %v124 = vld [vmem:[%s3 + $0x30] sm:$0xf]
    %v125 = vld [vmem:[%s3 + $0x34] sm:$0xf]
    %v126 = vld [vmem:[%s3 + $0x38] sm:$0xf]
    %v127 = vld [vmem:[%s3 + $0x3c] sm:$0xf]
    %v128 = vld [vmem:[%s4] sm:$0x1]
    %v130 = vperm.slane %v128, 0
    %v148 = vunpack.c.l.b16 %v112
    %v149 = vunpack.c.l.b16 %v113
    %v150 = vunpack.c.l.b16 %v114
    %v151 = vunpack.c.l.b16 %v115
    %v152 = vunpack.c.l.b16 %v116
    %v153 = vunpack.c.l.b16 %v117
    %v154 = vunpack.c.l.b16 %v118
    %v155 = vunpack.c.l.b16 %v119
    %v156 = vunpack.c.l.b16 %v120
    %v157 = vunpack.c.l.b16 %v121
    %v158 = vunpack.c.l.b16 %v122
    %v159 = vunpack.c.l.b16 %v123
    %v160 = vunpack.c.l.b16 %v124
    %v161 = vunpack.c.l.b16 %v125
    %v162 = vunpack.c.l.b16 %v126
    %v163 = vunpack.c.l.b16 %v127
    %v164 = vpack.c.b16 %v149, %v148
    %v165 = vpack.c.b16 %v151, %v150
    %v166 = vpack.c.b16 %v153, %v152
    %v167 = vpack.c.b16 %v155, %v154
    %v168 = vpack.c.b16 %v157, %v156
    %v169 = vpack.c.b16 %v159, %v158
    %v170 = vpack.c.b16 %v161, %v160
    %v171 = vpack.c.b16 %v163, %v162
    %180 = vmatpush.bf16.msra.mxu0 %v171
    %181 = vmatpush.bf16.msra.mxu0 %v170
    %182 = vmatpush.bf16.msra.mxu0 %v169
    %183 = vmatpush.bf16.msra.mxu0 %v168
    %184 = vmatpush.bf16.msra.mxu0 %v167
    %185 = vmatpush.bf16.msra.mxu0 %v166
    %186 = vmatpush.bf16.msra.mxu0 %v165
    %187 = vmatpush.bf16.msra.mxu0 %v164
    %188 = vmatmul.bf16.gmra.mxu0 %v111
    %v189 = vpop.f32.mrf.mxu0
    %v190 = vadd.f32 %v130, %v189
    %v191 = vpop.f32.mrf.mxu0
    %192 = vdwg.mxu0
    %v193 = vmax.f32 %v190, 0.0
    %v194 = vld [vmem:[%s5] sm:$0xff]
    %195 = vmatpush.xpose.msra.mxu0 0.0
    %196 = vmatpush.xpose.msra.mxu0 0.0
    %197 = vmatpush.xpose.msra.mxu0 0.0
    %198 = vmatpush.xpose.msra.mxu0 0.0
    %199 = vmatpush.xpose.msra.mxu0 0.0
    %200 = vmatpush.xpose.msra.mxu0 0.0
    %201 = vmatpush.xpose.msra.mxu0 0.0
    %202 = vmatpush.xpose.msra.mxu0 0.0
    %203 = vmatpush.xpose.msra.mxu0 0.0
    %204 = vmatpush.xpose.msra.mxu0 0.0
    %205 = vmatpush.xpose.msra.mxu0 0.0
    %206 = vmatpush.xpose.msra.mxu0 0.0
    %207 = vmatpush.xpose.msra.mxu0 0.0
    %208 = vmatpush.xpose.msra.mxu0 0.0
    %209 = vmatpush.xpose.msra.mxu0 0.0
    %210 = vmatpush.xpose.msra.mxu0 %v193
    %211 = vmatmul.f32.gmra.mxu0 %v194
    %v212 = vpop.f32.mrf.mxu0
    %v213 = vadd.f32 0.0, %v212
    %214 = vdwg.mxu0
    %s215 = sld [smem:[#allocation2]]
    %v216 = vstv %s215
    %v217 = vadd.f32 %v213, %v216
    %v218 = vxor.u32 %v217, 2147483648
    %v219 = vmul.f32 %v218, 1.442695
    %v220 = vpow.pop %v219
    %v221 = vadd.f32 %v220, 1.0
    %v222 = vrcp.pop %v221
    %v223 = vmul.f32 %v221, %v222
    %v224 = vsub.f32 1.0, %v223
    %v225 = vmul.f32 %v222, %v224
    %v226 = vadd.f32 %v222, %v225
    %vm227 = vweird.f32 %v221
    %vm228 = vweird.f32 %v222
    %vm229 = vmor %vm227, %vm228
    %v230 = vsel %vm229, %v222, %v226
    %v231 = vand.u32 2147483647, %v221
    %vm232 = vcmp.eq.f32.partialorder %v231, 8.507059e+37
    %v233 = vand.u32 %v221, 2147483648
    %v234 = vor.u32 1.1754944e-38, %v233
    %v235 = vsel %vm232, %v234, %v230
    %v236 = vmul.f32 1.0, %v235
    %vm237 = vcmask 57344
    %238 = vst.msk [vmem:[#allocation3] sm:$0x1] %vm237, %v236
    // Predicated region
    $region30: #{weight_network_forward.1} parent=1 // pred_check
      _
    $region31: #{weight_network_forward.1} parent=1 // pred_check_branch
      %240 = sbr.rel (0) target = $region33
    $region32: #{weight_network_forward.1} parent=1 // pred_region
      %242 = vsyncadd [#allocation4], 0
      %s244 = sshll.u32 [#allocation3], 4
      %s245 = int_to_ptr.vmem [resolvable:$true] %s244
      %s246 = sshll.u32 %s7, 4
      %s247 = int_to_ptr.hbm [resolvable:$true] %s246
      %249 = dma.vmem_to_hbm [thread:$0]  %s245, 16, %s247, [#allocation4]
    $region33: #{weight_network_forward.1} parent=1 // pred_fallthru
      _
    // Predicated region
    $region34: #{weight_network_forward.1} parent=1 // pred_check
      _
    $region35: #{weight_network_forward.1} parent=1 // pred_check_branch
      %251 = sbr.rel (0) target = $region37
    $region36: #{weight_network_forward.1} parent=1 // pred_region
      %253 = dma.done [#allocation4], 16
    $region37: #{weight_network_forward.1} parent=1 // pred_fallthru
      _
    %254 = vsyncpa [#allocation4], 1

</llo_original>
